<compile_context>
chip_gen: v5e
topology: v5e:2x2
jax: 0.10.0
libtpu: 0.0.40
codegen_flags: <defaults>
</compile_context>

<pallas_src>
import jax
import jax.numpy as jnp
from jax.experimental import pallas as pl
from jax.experimental.pallas import tpu as pltpu


def _round_up(x, m):
    return (x + m - 1) // m * m


# ----------------------------- gate kernel ---------------------------------
def _gate_kernel(x_ref, wg_ref, bg_ref, o_ref):
    o_ref[...] = (
        jnp.dot(x_ref[...], wg_ref[...], preferred_element_type=jnp.float32)
        + bg_ref[...]
    )


def gate_logits(x, wg, bg, *, tile_n=128):
    """x: (N, d_model) f32; wg: (d_model, E); bg: (E,).  Returns (N, E) f32."""
    N, d_model = x.shape
    num_expert = wg.shape[1]
    e_pad = _round_up(max(num_expert, 128), 128)   # lane-dense output
    n_pad = _round_up(N, tile_n)

    x_p = jnp.zeros((n_pad, d_model), jnp.float32).at[:N].set(x)
    wg_p = jnp.zeros((d_model, e_pad), jnp.float32).at[:, :num_expert].set(wg)
    # padded expert columns get -1e30 so top_k can never select them
    bg_p = jnp.full((1, e_pad), -1e30, jnp.float32).at[0, :num_expert].set(bg)

    logits = pl.pallas_call(
        _gate_kernel,
        out_shape=jax.ShapeDtypeStruct((n_pad, e_pad), jnp.float32),
        grid=(n_pad // tile_n,),
        in_specs=[
            pl.BlockSpec((tile_n, d_model), lambda i: (i, 0)),
            pl.BlockSpec((d_model, e_pad), lambda i: (0, 0)),
            pl.BlockSpec((1, e_pad), lambda i: (0, 0)),
        ],
        out_specs=pl.BlockSpec((tile_n, e_pad), lambda i: (i, 0)),
        compiler_params=pltpu.CompilerParams(dimension_semantics=("parallel",)),
    )(x_p, wg_p, bg_p)
    return logits[:N, :num_expert]


# --------------------------- expert MLP kernel ------------------------------
def _moe_expert_kernel(nz_ref, x_ref, w1_ref, b1_ref, w2_ref, b2_ref, cw_ref, o_ref):
    i = pl.program_id(0)          # token tile
    e = pl.program_id(1)          # expert
    k = pl.program_id(2)          # d_hidden tile

    @pl.when((e == 0) & (k == 0))
    def _init():
        o_ref[...] = jnp.zeros_like(o_ref)

    # skip (token-tile, expert) pairs with no routed tokens
    tile_has_tokens = nz_ref[i * pl.num_programs(1) + e] > 0

    @pl.when(tile_has_tokens)
    def _compute():
        cw = cw_ref[0]                                           # (TILE_N, 1) f32
        h = jnp.dot(x_ref[...], w1_ref[0],
                    preferred_element_type=jnp.float32) + b1_ref[0]
        h = jax.nn.gelu(h, approximate=False)                    # torch.nn.GELU (erf)
        hw = (cw * h).astype(jnp.bfloat16)                       # fold gate score here
        o_ref[...] += jnp.dot(hw, w2_ref[0],
                              preferred_element_type=jnp.float32)

    @pl.when(tile_has_tokens & (k == 0))
    def _bias():
        o_ref[...] += cw_ref[0] * b2_ref[0]                      # b2 once per expert


def moe_expert_mlp(x, w1, b1, w2, b2, cw, *, tile_n=128, tile_h=256,
                   vmem_limit_bytes=48 * 1024 * 1024):
    """x: (N, d_model) f32; w1: (E, d_model, d_hidden); w2: (E, d_hidden, d_model);
    b1: (E, d_hidden); b2: (E, d_model); cw: (N, E) combine weights (0 off-route)."""
    N, d_model = x.shape
    num_expert, _, d_hidden = w1.shape

    n_pad = _round_up(N, tile_n)
    h_pad = _round_up(d_hidden, tile_h)
    num_tiles_n = n_pad // tile_n
    num_tiles_h = h_pad // tile_h

    # bf16 operands for the MXU; biases / accumulation stay in f32.
    x_p = jnp.zeros((n_pad, d_model), jnp.bfloat16).at[:N].set(
        x.astype(jnp.bfloat16))
    w1_p = jnp.zeros((num_expert, d_model, h_pad), jnp.bfloat16).at[
        :, :, :d_hidden].set(w1.astype(jnp.bfloat16))
    w2_p = jnp.zeros((num_expert, h_pad, d_model), jnp.bfloat16).at[
        :, :d_hidden, :].set(w2.astype(jnp.bfloat16))
    b1_p = jnp.zeros((num_expert, 1, h_pad), jnp.float32).at[
        :, 0, :d_hidden].set(b1.astype(jnp.float32))
    b2_p = b2.reshape(num_expert, 1, d_model).astype(jnp.float32)

    cw_p = jnp.zeros((n_pad, num_expert), jnp.float32).at[:N].set(cw)
    cw_t = jnp.transpose(cw_p).reshape(num_expert, n_pad, 1)

    # per-(token-tile, expert) nonzero flags -> SMEM via scalar prefetch
    nz = (cw_p.reshape(num_tiles_n, tile_n, num_expert) != 0.0).any(axis=1)
    nz = nz.astype(jnp.int32).reshape(-1)            # (num_tiles_n * num_expert,)

    grid_spec = pltpu.PrefetchScalarGridSpec(
        num_scalar_prefetch=1,
        grid=(num_tiles_n, num_expert, num_tiles_h),
        in_specs=[
            pl.BlockSpec((tile_n, d_model), lambda i, e, k, nz_r: (i, 0)),
            pl.BlockSpec((1, d_model, tile_h), lambda i, e, k, nz_r: (e, 0, k)),
            pl.BlockSpec((1, 1, tile_h), lambda i, e, k, nz_r: (e, 0, k)),
            pl.BlockSpec((1, tile_h, d_model), lambda i, e, k, nz_r: (e, k, 0)),
            pl.BlockSpec((1, 1, d_model), lambda i, e, k, nz_r: (e, 0, 0)),
            pl.BlockSpec((1, tile_n, 1), lambda i, e, k, nz_r: (e, i, 0)),
        ],
        out_specs=pl.BlockSpec((tile_n, d_model), lambda i, e, k, nz_r: (i, 0)),
    )

    out = pl.pallas_call(
        _moe_expert_kernel,
        out_shape=jax.ShapeDtypeStruct((n_pad, d_model), jnp.float32),
        grid_spec=grid_spec,
        compiler_params=pltpu.CompilerParams(
            dimension_semantics=("parallel", "arbitrary", "arbitrary"),
            vmem_limit_bytes=vmem_limit_bytes,
        ),
    )(nz, x_p, w1_p, b1_p, w2_p, b2_p, cw_t)
    return out[:N]


# ------------------------------ module glue ---------------------------------
def init_params(key, num_expert, d_model, d_hidden):
    k1, k2, k3, k4, k5, k6 = jax.random.split(key, 6)
    s1 = (2.0 / (d_model + d_hidden)) ** 0.5   # xavier-ish
    sg = (2.0 / (d_model + num_expert)) ** 0.5
    return {
        "w1": jax.random.normal(k1, (num_expert, d_model, d_hidden), jnp.float32) * s1,
        "b1": jax.random.normal(k2, (num_expert, d_hidden), jnp.float32) * 0.01,
        "w2": jax.random.normal(k3, (num_expert, d_hidden, d_model), jnp.float32) * s1,
        "b2": jax.random.normal(k4, (num_expert, d_model), jnp.float32) * 0.01,
        "wg": jax.random.normal(k5, (d_model, num_expert), jnp.float32) * sg,
        "bg": jax.random.normal(k6, (num_expert,), jnp.float32) * 0.01,
    }


def fmoe_transformer_mlp(inp, params, top_k=2):
    original_shape = inp.shape
    num_expert, d_model, _ = params["w1"].shape
    x = inp.reshape(-1, d_model).astype(jnp.float32)
    N = x.shape[0]

    # gate: linear -> top_k -> softmax over the top_k logits (kept in f32)
    logits = gate_logits(x, params["wg"], params["bg"])
    top_val, top_idx = jax.lax.top_k(logits, top_k)
    gate_score = jax.nn.softmax(top_val, axis=-1)                    # (N, top_k)

    # dense combine-weight matrix (N, num_expert), zero off the routed experts
    cw = jnp.zeros((N, num_expert), jnp.float32)
    cw = cw.at[jnp.arange(N)[:, None], top_idx].add(gate_score)

    out = moe_expert_mlp(x, params["w1"], params["b1"],
                         params["w2"], params["b2"], cw)
    return out.reshape(original_shape).astype(inp.dtype)


def reference(inp, params, top_k=2):
    num_expert, d_model, _ = params["w1"].shape
    x = inp.reshape(-1, d_model).astype(jnp.float32)
    logits = x @ params["wg"] + params["bg"]
    top_val, top_idx = jax.lax.top_k(logits, top_k)
    gate_score = jax.nn.softmax(top_val, axis=-1)
    ys = []
    for e in range(num_expert):
        h = jax.nn.gelu(x @ params["w1"][e] + params["b1"][e], approximate=False)
        ys.append(h @ params["w2"][e] + params["b2"][e])
    ys = jnp.stack(ys, axis=1)                                       # (N, E, d_model)
    routed = jnp.take_along_axis(ys, top_idx[:, :, None], axis=1)    # (N, top_k, d)
    out = jnp.einsum("nk,nkd->nd", gate_score, routed)
    return out.reshape(inp.shape)


if __name__ == "__main__":
    # small (but MXU-tile-aligned) synthetic config
    num_expert, d_model, d_hidden, top_k = 4, 256, 512, 2
    batch, seq = 2, 128                                # -> N = 256 tokens

    key = jax.random.PRNGKey(0)
    kx, kp = jax.random.split(key)
    x = jax.random.normal(kx, (batch, seq, d_model), jnp.float32)
    params = init_params(kp, num_expert, d_model, d_hidden)

    out = jax.block_until_ready(fmoe_transformer_mlp(x, params, top_k=top_k))
    ref = jax.block_until_ready(reference(x, params, top_k=top_k))

    assert out.shape == x.shape
    max_err = float(jnp.max(jnp.abs(out - ref)))
    assert jnp.allclose(out, ref, atol=3e-2, rtol=3e-2), f"max abs err {max_err}"
    print("KERNEL_OK")
</pallas_src>

<mosaic_0001>
module attributes {stable_mosaic.version = 11 : i64} {
  func.func @_gate_kernel(%arg0: i32, %arg1: memref<128x256xf32, #tpu.memory_space<vmem>>, %arg2: memref<256x128xf32, #tpu.memory_space<vmem>>, %arg3: memref<1x128xf32, #tpu.memory_space<vmem>>, %arg4: memref<128x128xf32, #tpu.memory_space<vmem>>) attributes {dimension_semantics = [#tpu.dimension_semantics<parallel>], iteration_bounds = array<i64: 2>, scalar_prefetch = 0 : i64, scratch_operands = 0 : i64, tpu.core_type = #tpu.core_type<tc>, window_params = [{transform_indices = @transform_0, window_bounds = array<i64: 128, 256>}, {pipeline_mode = #tpu.pipeline_mode<synchronous>, transform_indices = @transform_1, window_bounds = array<i64: 256, 128>}, {pipeline_mode = #tpu.pipeline_mode<synchronous>, transform_indices = @transform_2, window_bounds = array<i64: 1, 128>}, {transform_indices = @transform_3, window_bounds = array<i64: 128, 128>}]} {
    %c0 = arith.constant 0 : index
    %c0_0 = arith.constant 0 : index
    %0 = vector.load %arg1[%c0, %c0_0] : memref<128x256xf32, #tpu.memory_space<vmem>>, vector<128x256xf32>
    %c0_1 = arith.constant 0 : index
    %c0_2 = arith.constant 0 : index
    %1 = vector.load %arg2[%c0_1, %c0_2] : memref<256x128xf32, #tpu.memory_space<vmem>>, vector<256x128xf32>
    %cst = arith.constant dense<0.000000e+00> : vector<128x128xf32>
    %2 = tpu.matmul %0, %1, %cst {dimension_numbers = #tpu.dot_dimension_numbers<[1], [0], [0], [1], [0, 0, 1, 1], [], []>} : vector<128x256xf32>, vector<256x128xf32>, vector<128x128xf32> -> vector<128x128xf32>
    %c0_3 = arith.constant 0 : index
    %c0_4 = arith.constant 0 : index
    %3 = vector.load %arg3[%c0_3, %c0_4] : memref<1x128xf32, #tpu.memory_space<vmem>>, vector<1x128xf32>
    %4 = vector.broadcast %3 : vector<1x128xf32> to vector<128x128xf32>
    %5 = arith.addf %2, %4 : vector<128x128xf32>
    %c0_5 = arith.constant 0 : index
    %c0_6 = arith.constant 0 : index
    %6 = vector.load %arg4[%c0_5, %c0_6] : memref<128x128xf32, #tpu.memory_space<vmem>>, vector<128x128xf32>
    tpu.vector_store %arg4[%c0_5, %c0_6], %5 {strides = array<i32>} : memref<128x128xf32, #tpu.memory_space<vmem>>, vector<128x128xf32>,
    return
  }
  func.func @transform_0(%arg0: i32) -> (i32, i32) {
    %c0_i32 = arith.constant 0 : i32
    %c0_i32_0 = arith.constant 0 : i32
    return %arg0, %c0_i32 : i32, i32
  }
  func.func @transform_1(%arg0: i32) -> (i32, i32) {
    %c0_i32 = arith.constant 0 : i32
    %c0_i32_0 = arith.constant 0 : i32
    %c0_i32_1 = arith.constant 0 : i32
    return %c0_i32, %c0_i32_0 : i32, i32
  }
  func.func @transform_2(%arg0: i32) -> (i32, i32) {
    %c0_i32 = arith.constant 0 : i32
    %c0_i32_0 = arith.constant 0 : i32
    %c0_i32_1 = arith.constant 0 : i32
    return %c0_i32, %c0_i32_0 : i32, i32
  }
  func.func @transform_3(%arg0: i32) -> (i32, i32) {
    %c0_i32 = arith.constant 0 : i32
    %c0_i32_0 = arith.constant 0 : i32
    return %arg0, %c0_i32 : i32, i32
  }
}

</mosaic_0001>

<llo_original>
// kernel: tpu_custom_call.1
$region0: #{tpu_custom_call.1}
  #allocation0 [shape = 'u32[]', space=smem, size = 0x4, offset = 0x4, fixed_abs, tag = 'smem constant byte address 0x4 - core index']
  #allocation1 [shape = 'u32[72,128]{1,0:T(1,128)}', space=vmem, size = 0x9000, scoped, tag = 'internal scratch']
  %s0 = inlined_call_operand.hbm [shape: f32[256,256], index: 0, kind: input, shape index: {}]
  %s1 = inlined_call_operand.hbm [shape: f32[256,128], index: 1, kind: input, shape index: {}]
  %s2 = inlined_call_operand.vmem [shape: f32[1,128], index: 2, kind: input, shape index: {}]
  %s3 = inlined_call_operand.hbm [shape: f32[256,128], index: 3, kind: output, shape index: {}]
  %s4 = sld [smem:[#allocation0]]
  $region53: #{tpu_custom_call.1} parent=0
    _
  %s6 = ssub.s32 1, %s4
  %s7 = scalar_select 0, %s6, %s4
  $region1: #{tpu_custom_call.1} parent=0
    #allocation2 [shape = 'u8[262144]{0}', space=vmem, size = 0x40000, scoped, tag = 'input window, operand 0']
    #allocation3 [shape = 's32[2]{0}', space=sflag, size = 0x8, scoped, tag = 'scoped memory for tpu_custom_call.1']
    #allocation4 [shape = 's32[2]{0}', space=sflag, size = 0x8, scoped, tag = 'scoped memory for tpu_custom_call.1']
    #allocation5 [shape = 'u8[131072]{0}', space=vmem, size = 0x20000, scoped, tag = 'input window, operand 1, single buffered']
    #allocation6 [shape = 's32[1]{0}', space=sflag, size = 0x4, scoped, tag = 'scoped memory for tpu_custom_call.1']
    #allocation7 [shape = 'u8[131072]{0}', space=vmem, size = 0x20000, scoped, tag = 'output window, operand 0']
    %8 = vsyncpa [#allocation3], 0
    %s9 = scalar_lea.sflag [#allocation3], 1
    %10 = vsyncpa %s9, 0
    %11 = vsyncpa [#allocation6], 0
    %12 = vsyncpa [#allocation4], 0
    %s13 = scalar_lea.sflag [#allocation4], 1
    %14 = vsyncpa %s13, 0
    loop: start=0, step=1, limit=4
    $region2: #{tpu_custom_call.1} parent=1 // loop_pre_header
      _
    $region3: #{tpu_custom_call.1} parent=1 // loop_header
      %s16 = sphi 0, %s20
      %p17 = scmp.ge.s32.totalorder %s16, 4
      %s26 = sphi 0, %s28
      %s29 = sphi 0, %s26
      %s30 = sphi 0, %s29
      %s46 = sphi 0, %s30
      %s50 = sphi 0, %s50
      %s52 = sphi 0, %s50
      %s53 = sphi 0, %s52
      %s67 = sphi 0, %s53
      %s71 = sphi 0, %s71
      %s73 = sphi 0, %s71
      %s74 = sphi 0, %s73
      %s88 = sphi 0, %s74
      %s94 = sphi 0, %s96
      %s97 = sphi 0, %s94
      %s98 = sphi 0, %s97
      %s114 = sphi 0, %s98
    $region4: #{tpu_custom_call.1} parent=1 // loop_header_branch
      %19 = sbr.rel (%p17) target = $region8
    $region5: #{tpu_custom_call.1} parent=1 // loop_body
      %s21 = ssub.s32 %s16, 1
      %s22 = ssub.s32 %s16, 2
      %s23 = sadd.s32 %s16, 1
      %s24 = ssub.s32 %s16, %s23
      %p25 = scmp.eq.s32.totalorder %s24, 0
      %s27 = sadd.s32 %s26, 1
      %s28 = scalar_select %p25, %s26, %s27
      %p31 = pneg %p25
      %p32 = scmp.eq.s32.totalorder %s16, 1
      %p33 = por %p31, %p32
      %p34 = scmp.ne.s32.totalorder %s26, %s29
      %p35 = scmp.eq.s32.totalorder %s16, 0
      %p36 = por %p34, %p35
      %p37 = scmp.ne.s32.totalorder %s26, %s29
      %p38 = scmp.eq.s32.totalorder %s21, 1
      %p39 = por %p37, %p38
      %p40 = scmp.ne.s32.totalorder %s29, %s30
      %p41 = scmp.eq.s32.totalorder %s21, 0
      %p42 = por %p40, %p41
      %p43 = scmp.ne.s32.totalorder %s29, %s30
      %p44 = scmp.eq.s32.totalorder %s22, 1
      %p45 = por %p43, %p44
      %p47 = scmp.ne.s32.totalorder %s30, %s46
      %p48 = scmp.eq.s32.totalorder %s22, 0
      %p49 = por %p47, %p48
      %s51 = sadd.s32 %s50, 1
      %p54 = scmp.eq.s32.totalorder %s16, 1
      %p55 = scmp.ne.s32.totalorder %s50, %s52
      %p56 = scmp.eq.s32.totalorder %s16, 0
      %p57 = por %p55, %p56
      %p58 = scmp.ne.s32.totalorder %s50, %s52
      %p59 = scmp.eq.s32.totalorder %s21, 1
      %p60 = por %p58, %p59
      %p61 = scmp.ne.s32.totalorder %s52, %s53
      %p62 = scmp.eq.s32.totalorder %s21, 0
      %p63 = por %p61, %p62
      %p64 = scmp.ne.s32.totalorder %s52, %s53
      %p65 = scmp.eq.s32.totalorder %s22, 1
      %p66 = por %p64, %p65
      %p68 = scmp.ne.s32.totalorder %s53, %s67
      %p69 = scmp.eq.s32.totalorder %s22, 0
      %p70 = por %p68, %p69
      %s72 = sadd.s32 %s71, 1
      %p75 = scmp.eq.s32.totalorder %s16, 1
      %p76 = scmp.ne.s32.totalorder %s71, %s73
      %p77 = scmp.eq.s32.totalorder %s16, 0
      %p78 = por %p76, %p77
      %p79 = scmp.ne.s32.totalorder %s71, %s73
      %p80 = scmp.eq.s32.totalorder %s21, 1
      %p81 = por %p79, %p80
      %p82 = scmp.ne.s32.totalorder %s73, %s74
      %p83 = scmp.eq.s32.totalorder %s21, 0
      %p84 = por %p82, %p83
      %p85 = scmp.ne.s32.totalorder %s73, %s74
      %p86 = scmp.eq.s32.totalorder %s22, 1
      %p87 = por %p85, %p86
      %p89 = scmp.ne.s32.totalorder %s74, %s88
      %p90 = scmp.eq.s32.totalorder %s22, 0
      %p91 = por %p89, %p90
      %s92 = ssub.s32 %s16, %s23
      %p93 = scmp.eq.s32.totalorder %s92, 0
      %s95 = sadd.s32 %s94, 1
      %s96 = scalar_select %p93, %s94, %s95
      %p99 = pneg %p93
      %p100 = scmp.eq.s32.totalorder %s16, 1
      %p101 = por %p99, %p100
      %p102 = scmp.ne.s32.totalorder %s94, %s97
      %p103 = scmp.eq.s32.totalorder %s16, 0
      %p104 = por %p102, %p103
      %p105 = scmp.ne.s32.totalorder %s94, %s97
      %p106 = scmp.eq.s32.totalorder %s21, 1
      %p107 = por %p105, %p106
      %p108 = scmp.ne.s32.totalorder %s97, %s98
      %p109 = scmp.eq.s32.totalorder %s21, 0
      %p110 = por %p108, %p109
      %p111 = scmp.ne.s32.totalorder %s97, %s98
      %p112 = scmp.eq.s32.totalorder %s22, 1
      %p113 = por %p111, %p112
      %p115 = scmp.ne.s32.totalorder %s98, %s114
      %p116 = scmp.eq.s32.totalorder %s22, 0
      %p117 = por %p115, %p116
      %p118 = scmp.le.s32.totalorder 1, %s16
      %p119 = scmp.lt.s32.totalorder %s16, 3
      %p120 = pnand %p118, %p119
      %p121 = pneg %p120
      // Predicated region
      $region9: #{tpu_custom_call.1} parent=5 // pred_check
        _
      $region10: #{tpu_custom_call.1} parent=5 // pred_check_branch
        %123 = sbr.rel (%p120) target = $region12
      $region11: #{tpu_custom_call.1} parent=5 // pred_region
        %s124 = ssub.s32 %s16, 1
        // Predicated region
        $region13: #{tpu_custom_call.1} parent=11 // pred_check
          %p125 = pneg %p63
        $region14: #{tpu_custom_call.1} parent=11 // pred_check_branch
          %127 = sbr.rel (%p125) target = $region16
        $region15: #{tpu_custom_call.1} parent=11 // pred_region
          %129 = vsyncadd [#allocation6], 0
          %s130 = sshll.u32 %s1, 4
          %s131 = int_to_ptr.hbm [resolvable:$true] %s130
          %s132 = sshll.u32 [#allocation5], 4
          %s133 = int_to_ptr.vmem [resolvable:$true] %s132
          %138 = dma.hbm_to_vmem [thread:$0]  %s131, 4096, %s133, [#allocation6], 128, 128, 8
        $region16: #{tpu_custom_call.1} parent=11 // pred_fallthru
          _
        // Predicated region
        $region17: #{tpu_custom_call.1} parent=11 // pred_check
          %p139 = pneg %p84
        $region18: #{tpu_custom_call.1} parent=11 // pred_check_branch
          %141 = sbr.rel (%p139) target = $region20
        $region19: #{tpu_custom_call.1} parent=11 // pred_region
          _
        $region20: #{tpu_custom_call.1} parent=11 // pred_fallthru
          _
      $region12: #{tpu_custom_call.1} parent=5 // pred_fallthru
        _
      %p142 = scmp.lt.s32.totalorder %s16, 2
      // Predicated region
      $region21: #{tpu_custom_call.1} parent=5 // pred_check
        %p143 = pneg %p142
      $region22: #{tpu_custom_call.1} parent=5 // pred_check_branch
        %145 = sbr.rel (%p143) target = $region24
      $region23: #{tpu_custom_call.1} parent=5 // pred_region
        // Predicated region
        $region25: #{tpu_custom_call.1} parent=23 // pred_check
          %p146 = pneg %p36
        $region26: #{tpu_custom_call.1} parent=23 // pred_check_branch
          %148 = sbr.rel (%p146) target = $region28
        $region27: #{tpu_custom_call.1} parent=23 // pred_region
          %s149 = sand.u32 %s26, 1
          %s150 = scalar_lea.sflag [#allocation3], %s149
          %s151 = sand.u32 %s26, 1
          %s152 = smul.addr %s151, 256
          %s153 = scalar_lea.vmem [#allocation2], %s152
          %s154 = smul.u32 16, %s16
          %156 = vsyncadd %s150, 0
          %s157 = smul.addr %s154, 2
          %s158 = smul.addr %s157, 8
          %s159 = scalar_lea.hbm %s0, %s158
          %s160 = sshll.u32 %s159, 4
          %s161 = int_to_ptr.hbm [resolvable:$true] %s160
          %s162 = sshll.u32 %s153, 4
          %s163 = int_to_ptr.vmem [resolvable:$true] %s162
          %168 = dma.hbm_to_vmem [thread:$0]  %s161, 4096, %s163, %s150, 256, 256, 16
        $region28: #{tpu_custom_call.1} parent=23 // pred_fallthru
          _
      $region24: #{tpu_custom_call.1} parent=5 // pred_fallthru
        _
      %p169 = scmp.le.s32.totalorder 1, %s16
      %p170 = scmp.lt.s32.totalorder %s16, 3
      %p171 = pnand %p169, %p170
      %p172 = pneg %p171
      // Predicated region
      $region29: #{tpu_custom_call.1} parent=5 // pred_check
        _
      $region30: #{tpu_custom_call.1} parent=5 // pred_check_branch
        %174 = sbr.rel (%p171) target = $region32
      $region31: #{tpu_custom_call.1} parent=5 // pred_region
        %s175 = ssub.s32 %s16, 1
        %s176 = sand.u32 %s29, 1
        %s177 = scalar_lea.sflag [#allocation3], %s176
        %s178 = sand.u32 %s29, 1
        %s179 = smul.addr %s178, 256
        %s180 = scalar_lea.vmem [#allocation2], %s179
        // Predicated region
        $region33: #{tpu_custom_call.1} parent=31 // pred_check
          %p181 = pneg %p42
        $region34: #{tpu_custom_call.1} parent=31 // pred_check_branch
          %183 = sbr.rel (%p181) target = $region36
        $region35: #{tpu_custom_call.1} parent=31 // pred_region
          %185 = dma.done %s177, 4096
        $region36: #{tpu_custom_call.1} parent=31 // pred_fallthru
          _
        // Predicated region
        $region37: #{tpu_custom_call.1} parent=31 // pred_check
          %p186 = pneg %p63
        $region38: #{tpu_custom_call.1} parent=31 // pred_check_branch
          %188 = sbr.rel (%p186) target = $region40
        $region39: #{tpu_custom_call.1} parent=31 // pred_region
          %190 = dma.done [#allocation6], 4096
        $region40: #{tpu_custom_call.1} parent=31 // pred_fallthru
          _
        %s191 = sand.u32 %s29, 1
        %s192 = scalar_lea.sflag [#allocation3], %s191
        %s193 = sand.u32 %s29, 1
        %s194 = smul.addr %s193, 256
        %s195 = scalar_lea.vmem [#allocation2], %s194
        %p196 = pneg %p42
        %p197 = pneg %p39
        %p198 = pneg %p63
        %p199 = pneg %p60
        %p200 = pneg %p84
        %p201 = pneg %p81
        %p202 = pneg %p110
        %p203 = pneg %p107
        %s204 = sand.u32 %s97, 1
        %s205 = scalar_lea.sflag [#allocation4], %s204
        %s206 = sand.u32 %s97, 1
        %s207 = smul.addr %s206, 128
        %s208 = scalar_lea.vmem [#allocation7], %s207
        %s209 = smul.u32 16, %s21
        %s210 = smul.u32 16, %s21
        %v211 = vld [vmem:[%s180] sm:$0xff]
        %v212 = vld [vmem:[%s180 + $0x8] sm:$0xff]
        %v213 = vld [vmem:[%s180 + $0x10] sm:$0xff]
        %v214 = vld [vmem:[%s180 + $0x18] sm:$0xff]
        %v215 = vld [vmem:[%s180 + $0x20] sm:$0xff]
        %v216 = vld [vmem:[%s180 + $0x28] sm:$0xff]
        %v217 = vld [vmem:[%s180 + $0x30] sm:$0xff]
        %v218 = vld [vmem:[%s180 + $0x38] sm:$0xff]
        %v219 = vld [vmem:[%s180 + $0x40] sm:$0xff]
        %v220 = vld [vmem:[%s180 + $0x48] sm:$0xff]
        %v221 = vld [vmem:[%s180 + $0x50] sm:$0xff]
        %v222 = vld [vmem:[%s180 + $0x58] sm:$0xff]
        %v223 = vld [vmem:[%s180 + $0x60] sm:$0xff]
        %v224 = vld [vmem:[%s180 + $0x68] sm:$0xff]
        %v225 = vld [vmem:[%s180 + $0x70] sm:$0xff]
        %v226 = vld [vmem:[%s180 + $0x78] sm:$0xff]
        %v227 = vld [vmem:[%s180 + $0x80] sm:$0xff]
        %v228 = vld [vmem:[%s180 + $0x88] sm:$0xff]
        %v229 = vld [vmem:[%s180 + $0x90] sm:$0xff]
        %v230 = vld [vmem:[%s180 + $0x98] sm:$0xff]
        %v231 = vld [vmem:[%s180 + $0xa0] sm:$0xff]
        %v232 = vld [vmem:[%s180 + $0xa8] sm:$0xff]
        %v233 = vld [vmem:[%s180 + $0xb0] sm:$0xff]
        %v234 = vld [vmem:[%s180 + $0xb8] sm:$0xff]
        %v235 = vld [vmem:[%s180 + $0xc0] sm:$0xff]
        %v236 = vld [vmem:[%s180 + $0xc8] sm:$0xff]
        %v237 = vld [vmem:[%s180 + $0xd0] sm:$0xff]
        %v238 = vld [vmem:[%s180 + $0xd8] sm:$0xff]
        %v239 = vld [vmem:[%s180 + $0xe0] sm:$0xff]
        %v240 = vld [vmem:[%s180 + $0xe8] sm:$0xff]
        %v241 = vld [vmem:[%s180 + $0xf0] sm:$0xff]
        %v242 = vld [vmem:[%s180 + $0xf8] sm:$0xff]
        %v243 = vld [vmem:[#allocation5] sm:$0xff]
        %v244 = vld [vmem:[#allocation5 + $0x8] sm:$0xff]
        %v245 = vld [vmem:[#allocation5 + $0x10] sm:$0xff]
        %v246 = vld [vmem:[#allocation5 + $0x18] sm:$0xff]
        %v247 = vld [vmem:[#allocation5 + $0x20] sm:$0xff]
        %v248 = vld [vmem:[#allocation5 + $0x28] sm:$0xff]
        %v249 = vld [vmem:[#allocation5 + $0x30] sm:$0xff]
        %v250 = vld [vmem:[#allocation5 + $0x38] sm:$0xff]
        %v251 = vld [vmem:[#allocation5 + $0x40] sm:$0xff]
        %v252 = vld [vmem:[#allocation5 + $0x48] sm:$0xff]
        %v253 = vld [vmem:[#allocation5 + $0x50] sm:$0xff]
        %v254 = vld [vmem:[#allocation5 + $0x58] sm:$0xff]
        %v255 = vld [vmem:[#allocation5 + $0x60] sm:$0xff]
        %v256 = vld [vmem:[#allocation5 + $0x68] sm:$0xff]
        %v257 = vld [vmem:[#allocation5 + $0x70] sm:$0xff]
        %v258 = vld [vmem:[#allocation5 + $0x78] sm:$0xff]
        %v259 = vld [vmem:[#allocation5 + $0x80] sm:$0xff]
        %v260 = vld [vmem:[#allocation5 + $0x88] sm:$0xff]
        %v261 = vld [vmem:[#allocation5 + $0x90] sm:$0xff]
        %v262 = vld [vmem:[#allocation5 + $0x98] sm:$0xff]
        %v263 = vld [vmem:[#allocation5 + $0xa0] sm:$0xff]
        %v264 = vld [vmem:[#allocation5 + $0xa8] sm:$0xff]
        %v265 = vld [vmem:[#allocation5 + $0xb0] sm:$0xff]
        %v266 = vld [vmem:[#allocation5 + $0xb8] sm:$0xff]
        %v267 = vld [vmem:[#allocation5 + $0xc0] sm:$0xff]
        %v268 = vld [vmem:[#allocation5 + $0xc8] sm:$0xff]
        %v269 = vld [vmem:[#allocation5 + $0xd0] sm:$0xff]
        %v270 = vld [vmem:[#allocation5 + $0xd8] sm:$0xff]
        %v271 = vld [vmem:[#allocation5 + $0xe0] sm:$0xff]
        %v272 = vld [vmem:[#allocation5 + $0xe8] sm:$0xff]
        %v273 = vld [vmem:[#allocation5 + $0xf0] sm:$0xff]
        %v274 = vld [vmem:[#allocation5 + $0xf8] sm:$0xff]
        %v275 = vld [vmem:[%s2] sm:$0x1]
        %v277 = vperm.slane %v275, 0
        %279 = vmatpush.msra.mxu0 %v258
        %280 = vmatpush.msra.mxu0 %v257
        %281 = vmatpush.msra.mxu0 %v256
        %282 = vmatpush.msra.mxu0 %v255
        %283 = vmatpush.msra.mxu0 %v254
        %284 = vmatpush.msra.mxu0 %v253
        %285 = vmatpush.msra.mxu0 %v252
        %286 = vmatpush.msra.mxu0 %v251
        %287 = vmatpush.msra.mxu0 %v250
        %288 = vmatpush.msra.mxu0 %v249
        %289 = vmatpush.msra.mxu0 %v248
        %290 = vmatpush.msra.mxu0 %v247
        %291 = vmatpush.msra.mxu0 %v246
        %292 = vmatpush.msra.mxu0 %v245
        %293 = vmatpush.msra.mxu0 %v244
        %294 = vmatpush.msra.mxu0 %v243
        %295 = vmatmul.f32.gmra.mxu0 %v211
        %v296 = vpop.f32.mrf.mxu0
        %v297 = vadd.f32 %v277, %v296
        %298 = vmatmul.f32.gmra.mxu0 %v213
        %v299 = vpop.f32.mrf.mxu0
        %v300 = vadd.f32 %v277, %v299
        %301 = vmatmul.f32.gmra.mxu0 %v215
        %v302 = vpop.f32.mrf.mxu0
        %v303 = vadd.f32 %v277, %v302
        %304 = vmatmul.f32.gmra.mxu0 %v217
        %v305 = vpop.f32.mrf.mxu0
        %v306 = vadd.f32 %v277, %v305
        %307 = vmatmul.f32.gmra.mxu0 %v219
        %v308 = vpop.f32.mrf.mxu0
        %v309 = vadd.f32 %v277, %v308
        %310 = vmatmul.f32.gmra.mxu0 %v221
        %v311 = vpop.f32.mrf.mxu0
        %v312 = vadd.f32 %v277, %v311
        %313 = vmatmul.f32.gmra.mxu0 %v223
        %v314 = vpop.f32.mrf.mxu0
        %v315 = vadd.f32 %v277, %v314
        %316 = vmatmul.f32.gmra.mxu0 %v225
        %v317 = vpop.f32.mrf.mxu0
        %v318 = vadd.f32 %v277, %v317
        %319 = vmatmul.f32.gmra.mxu0 %v227
        %v320 = vpop.f32.mrf.mxu0
        %v321 = vadd.f32 %v277, %v320
        %322 = vmatmul.f32.gmra.mxu0 %v229
        %v323 = vpop.f32.mrf.mxu0
        %v324 = vadd.f32 %v277, %v323
        %325 = vmatmul.f32.gmra.mxu0 %v231
        %v326 = vpop.f32.mrf.mxu0
        %v327 = vadd.f32 %v277, %v326
        %328 = vmatmul.f32.gmra.mxu0 %v233
        %v329 = vpop.f32.mrf.mxu0
        %v330 = vadd.f32 %v277, %v329
        %331 = vmatmul.f32.gmra.mxu0 %v235
        %v332 = vpop.f32.mrf.mxu0
        %v333 = vadd.f32 %v277, %v332
        %334 = vmatmul.f32.gmra.mxu0 %v237
        %v335 = vpop.f32.mrf.mxu0
        %v336 = vadd.f32 %v277, %v335
        %337 = vmatmul.f32.gmra.mxu0 %v239
        %v338 = vpop.f32.mrf.mxu0
        %v339 = vadd.f32 %v277, %v338
        %340 = vmatmul.f32.gmra.mxu0 %v241
        %v341 = vpop.f32.mrf.mxu0
        %v342 = vadd.f32 %v277, %v341
        %343 = vdwg.mxu0
        %344 = vmatpush.msra.mxu0 %v274
        %345 = vmatpush.msra.mxu0 %v273
        %346 = vmatpush.msra.mxu0 %v272
        %347 = vmatpush.msra.mxu0 %v271
        %348 = vmatpush.msra.mxu0 %v270
        %349 = vmatpush.msra.mxu0 %v269
        %350 = vmatpush.msra.mxu0 %v268
        %351 = vmatpush.msra.mxu0 %v267
        %352 = vmatpush.msra.mxu0 %v266
        %353 = vmatpush.msra.mxu0 %v265
        %354 = vmatpush.msra.mxu0 %v264
        %355 = vmatpush.msra.mxu0 %v263
        %356 = vmatpush.msra.mxu0 %v262
        %357 = vmatpush.msra.mxu0 %v261
        %358 = vmatpush.msra.mxu0 %v260
        %359 = vmatpush.msra.mxu0 %v259
        %360 = vmatmul.f32.gmra.mxu0 %v212
        %v361 = vpop.f32.mrf.mxu0
        %v362 = vadd.f32 %v297, %v361
        %363 = vmatmul.f32.gmra.mxu0 %v214
        %v364 = vpop.f32.mrf.mxu0
        %v365 = vadd.f32 %v300, %v364
        %366 = vmatmul.f32.gmra.mxu0 %v216
        %v367 = vpop.f32.mrf.mxu0
        %v368 = vadd.f32 %v303, %v367
        %369 = vmatmul.f32.gmra.mxu0 %v218
        %v370 = vpop.f32.mrf.mxu0
        %v371 = vadd.f32 %v306, %v370
        %372 = vmatmul.f32.gmra.mxu0 %v220
        %v373 = vpop.f32.mrf.mxu0
        %v374 = vadd.f32 %v309, %v373
        %375 = vmatmul.f32.gmra.mxu0 %v222
        %v376 = vpop.f32.mrf.mxu0
        %v377 = vadd.f32 %v312, %v376
        %378 = vmatmul.f32.gmra.mxu0 %v224
        %v379 = vpop.f32.mrf.mxu0
        %v380 = vadd.f32 %v315, %v379
        %381 = vmatmul.f32.gmra.mxu0 %v226
        %v382 = vpop.f32.mrf.mxu0
        %v383 = vadd.f32 %v318, %v382
        %384 = vmatmul.f32.gmra.mxu0 %v228
        %v385 = vpop.f32.mrf.mxu0
        %v386 = vadd.f32 %v321, %v385
        %387 = vmatmul.f32.gmra.mxu0 %v230
        %v388 = vpop.f32.mrf.mxu0
        %v389 = vadd.f32 %v324, %v388
        %390 = vmatmul.f32.gmra.mxu0 %v232
        %v391 = vpop.f32.mrf.mxu0
        %v392 = vadd.f32 %v327, %v391
        %393 = vmatmul.f32.gmra.mxu0 %v234
        %v394 = vpop.f32.mrf.mxu0
        %v395 = vadd.f32 %v330, %v394
        %396 = vmatmul.f32.gmra.mxu0 %v236
        %v397 = vpop.f32.mrf.mxu0
        %v398 = vadd.f32 %v333, %v397
        %399 = vmatmul.f32.gmra.mxu0 %v238
        %v400 = vpop.f32.mrf.mxu0
        %v401 = vadd.f32 %v336, %v400
        %402 = vmatmul.f32.gmra.mxu0 %v240
        %v403 = vpop.f32.mrf.mxu0
        %v404 = vadd.f32 %v339, %v403
        %405 = vmatmul.f32.gmra.mxu0 %v242
        %v406 = vpop.f32.mrf.mxu0
        %v407 = vadd.f32 %v342, %v406
        %408 = vdwg.mxu0
        %409 = vst [vmem:[%s208] sm:$0xff] %v362
        %410 = vst [vmem:[%s208 + $0x8] sm:$0xff] %v365
        %411 = vst [vmem:[%s208 + $0x10] sm:$0xff] %v368
        %412 = vst [vmem:[%s208 + $0x18] sm:$0xff] %v371
        %413 = vst [vmem:[%s208 + $0x20] sm:$0xff] %v374
        %414 = vst [vmem:[%s208 + $0x28] sm:$0xff] %v377
        %415 = vst [vmem:[%s208 + $0x30] sm:$0xff] %v380
        %416 = vst [vmem:[%s208 + $0x38] sm:$0xff] %v383
        %417 = vst [vmem:[%s208 + $0x40] sm:$0xff] %v386
        %418 = vst [vmem:[%s208 + $0x48] sm:$0xff] %v389
        %419 = vst [vmem:[%s208 + $0x50] sm:$0xff] %v392
        %420 = vst [vmem:[%s208 + $0x58] sm:$0xff] %v395
        %421 = vst [vmem:[%s208 + $0x60] sm:$0xff] %v398
        %422 = vst [vmem:[%s208 + $0x68] sm:$0xff] %v401
        %423 = vst [vmem:[%s208 + $0x70] sm:$0xff] %v404
        %424 = vst [vmem:[%s208 + $0x78] sm:$0xff] %v407
        %s425 = sand.u32 %s97, 1
        %s426 = scalar_lea.sflag [#allocation4], %s425
        %s427 = sand.u32 %s97, 1
        %s428 = smul.addr %s427, 128
        %s429 = scalar_lea.vmem [#allocation7], %s428
        // Predicated region
        $region41: #{tpu_custom_call.1} parent=31 // pred_check
          %p430 = pneg %p107
        $region42: #{tpu_custom_call.1} parent=31 // pred_check_branch
          %432 = sbr.rel (%p430) target = $region44
        $region43: #{tpu_custom_call.1} parent=31 // pred_region
          %s433 = smul.u32 16, %s21
          %435 = vsyncadd %s426, 0
          %s436 = smul.addr %s433, 8
          %s437 = scalar_lea.hbm %s3, %s436
          %s438 = sshll.u32 %s429, 4
          %s439 = int_to_ptr.vmem [resolvable:$true] %s438
          %s440 = sshll.u32 %s437, 4
          %s441 = int_to_ptr.hbm [resolvable:$true] %s440
          %446 = dma.vmem_to_hbm [thread:$0]  %s439, 2048, %s441, %s426, 128, 128, 8
        $region44: #{tpu_custom_call.1} parent=31 // pred_fallthru
          _
      $region32: #{tpu_custom_call.1} parent=5 // pred_fallthru
        _
      %p447 = scmp.le.s32.totalorder 2, %s16
      // Predicated region
      $region45: #{tpu_custom_call.1} parent=5 // pred_check
        %p448 = pneg %p447
      $region46: #{tpu_custom_call.1} parent=5 // pred_check_branch
        %450 = sbr.rel (%p448) target = $region48
      $region47: #{tpu_custom_call.1} parent=5 // pred_region
        %s451 = ssub.s32 %s16, 2
        // Predicated region
        $region49: #{tpu_custom_call.1} parent=47 // pred_check
          %p452 = pneg %p113
        $region50: #{tpu_custom_call.1} parent=47 // pred_check_branch
          %454 = sbr.rel (%p452) target = $region52
        $region51: #{tpu_custom_call.1} parent=47 // pred_region
          %s455 = sand.u32 %s98, 1
          %s456 = scalar_lea.sflag [#allocation4], %s455
          %s457 = sand.u32 %s98, 1
          %s458 = smul.addr %s457, 128
          %s459 = scalar_lea.vmem [#allocation7], %s458
          %461 = dma.done %s456, 2048
        $region52: #{tpu_custom_call.1} parent=47 // pred_fallthru
          _
      $region48: #{tpu_custom_call.1} parent=5 // pred_fallthru
        _
    $region6: #{tpu_custom_call.1} parent=1 // loop_footer
      %s20 = sadd.s32 1, %s16
    $region7: #{tpu_custom_call.1} parent=1 // loop_footer_branch
      %15 = sbr.rel target = $region3
    $region8: #{tpu_custom_call.1} parent=1 // loop_exit
      _
    %462 = vsyncpa [#allocation3], 1
    %s463 = scalar_lea.sflag [#allocation3], 1
    %464 = vsyncpa %s463, 1
    %465 = vsyncpa [#allocation6], 1
    %466 = vsyncpa [#allocation4], 1
    %s467 = scalar_lea.sflag [#allocation4], 1
    %468 = vsyncpa %s467, 1

</llo_original>
